<compile_context>
chip_gen: v7x
topology: tpu7x:2x2x1
jax: 0.10.0
libtpu: 0.0.40
codegen_flags: <defaults>
</compile_context>

<pallas_src>
import functools

import jax
import jax.numpy as jnp
from jax.experimental import pallas as pl
from jax.experimental.pallas import tpu as pltpu


def _round_up(x, m):
    return (x + m - 1) // m * m


def _vmem_capacity_bytes():
    """Physical VMEM per TensorCore; conservative fallback (v7x: 64 MiB)."""
    try:
        info = pltpu.get_tpu_info()
        cap = getattr(info, "vmem_capacity_bytes", None)
        if cap:
            return int(cap)
    except Exception:
        pass
    return 64 << 20


def _encoder_kernel(img_ref, w_ref, b_ref, feat_ref, mean_ref, *,
                    inv_regions, normalize, compute_dtype):
    # img_ref : (TB, R_pad, D_pad)  f32 or compute dtype
    # w_ref   : (D_pad, E_pad)      compute dtype (fc weight, pre-transposed)
    # b_ref   : (1, E_pad)          f32 bias
    # feat_ref: (TB, R_pad, E_pad)  features (l2-normalized unless no_imgnorm)
    # mean_ref: (TB, E_pad)         f32 mean of pre-norm features over regions
    tb, r_pad, d_pad = img_ref.shape
    e_pad = w_ref.shape[1]

    x = img_ref[...].astype(compute_dtype).reshape(tb * r_pad, d_pad)
    mm = jnp.dot(x, w_ref[...], preferred_element_type=jnp.float32)
    mm = mm.reshape(tb, r_pad, e_pad)            # aligned dims -> layout-free reshape

    b = b_ref[...]                               # (1, E_pad) f32
    # Padded region rows of x are zero -> their matmul rows are zero, so the
    # sum over R_pad equals the sum over the real R.  Bias is added once.
    mean_ref[...] = jnp.sum(mm, axis=1) * inv_regions + b

    f = mm + b
    if normalize:
        # l2norm: X * rsqrt(sum(X^2) + eps); one EUP op, VALU stays free.
        f = f * jax.lax.rsqrt(jnp.sum(f * f, axis=-1, keepdims=True) + 1e-8)
    feat_ref[...] = f.astype(feat_ref.dtype)


def encoder_image_precomp(images, weight, bias, *, no_imgnorm=False,
                          compute_dtype=jnp.bfloat16,
                          features_dtype=jnp.float32):
    """Forward of EncoderImagePrecomp.

    images: (B, R, D) f32; weight: (E, D) torch nn.Linear layout; bias: (E,).
    Returns (features (B, R, E), features_mean (B, E)).
    NOTE: matmul operands are cast to bf16 (f32 accumulation) — an intentional
    accuracy tradeoff vs. PyTorch's f32 nn.Linear.
    """
    B, R, D = images.shape
    E = weight.shape[0]

    r_pad = R if R % 8 == 0 else _round_up(R, 8)
    d_pad = D if D % 128 == 0 else _round_up(D, 128)
    e_pad = E if E % 128 == 0 else _round_up(E, 128)
    # TODO(synk): on v6e/v7x round newly-padded D/E to 256 (2x256x256 MXU fill);
    # typical SCAN dims (2048/1024) are already 256-aligned so this is skipped.

    cdt = jnp.dtype(compute_dtype)
    out_bytes = jnp.dtype(features_dtype).itemsize
    # Wrapper pads (fused with bf16 cast) only when some dim is unaligned;
    # otherwise images stream in as f32 and are cast inside the kernel.
    wrapper_pads = (r_pad != R) or (d_pad != D) or (B % 8 != 0)
    in_bytes = cdt.itemsize if wrapper_pads else jnp.dtype(images.dtype).itemsize

    # ---- generation-aware tile / VMEM budget ------------------------------
    cap = _vmem_capacity_bytes()
    budget = max(16 << 20, min(int(cap * 0.45), 80 << 20))   # v7x ~29M, v5e/v6e ~58M
    weight_bytes = d_pad * e_pad * cdt.itemsize + e_pad * 4  # resident, single-buffered

    def step_bytes(t):
        rows = t * r_pad
        return (2 * rows * d_pad * in_bytes        # input tile (double-buffered)
                + 2 * rows * e_pad * out_bytes     # feature tile (double-buffered)
                + 2 * t * e_pad * 4                # mean tile (double-buffered)
                + 2 * rows * e_pad * 4)            # live f32 matmul/epilogue temp

    b_ceil = _round_up(B, 8)
    tb = max(8, _round_up(pl.cdiv(1024, r_pad), 8))   # ~1024 MXU rows per step
    tb = min(tb, b_ceil)
    if b_ceil >= 16:                                  # keep >=2 steps (v7x: 2 TCs)
        tb = min(tb, _round_up(pl.cdiv(b_ceil, 2), 8))
    while tb > 8 and step_bytes(tb) + weight_bytes > budget:
        tb -= 8
    if B % 8 == 0:                                    # prefer tb | B: no batch pad
        while tb > 8 and B % tb != 0:
            tb -= 8

    b_pad = pl.cdiv(B, tb) * tb
    grid = (b_pad // tb,)
    vmem_limit = int(max(step_bytes(tb) + 2 * weight_bytes + (2 << 20), 16 << 20))

    # ---- parameter / input prep -------------------------------------------
    # NOTE: in production, store the fc weight pre-transposed/pre-cast as a
    # (D, E) compute_dtype array so this prep is not an HBM pass per call.
    w_t = weight.T.astype(compute_dtype)
    if (d_pad, e_pad) != (D, E):
        w_t = jnp.pad(w_t, ((0, d_pad - D), (0, e_pad - E)))
    b2 = bias.astype(jnp.float32)
    if e_pad != E:
        b2 = jnp.pad(b2, (0, e_pad - E))
    b2 = b2.reshape(1, e_pad)

    if (b_pad, r_pad, d_pad) != (B, R, D):
        x = jnp.pad(images.astype(compute_dtype),
                    ((0, b_pad - B), (0, r_pad - R), (0, d_pad - D)))
    else:
        x = images                                    # f32, cast inside the kernel

    kernel = functools.partial(_encoder_kernel, inv_regions=1.0 / R,
                               normalize=not no_imgnorm,
                               compute_dtype=compute_dtype)

    def make_call(single_buffer_params):
        pm = dict(pipeline_mode=pl.Buffered(1)) if single_buffer_params else {}
        return pl.pallas_call(
            kernel,
            out_shape=(
                jax.ShapeDtypeStruct((b_pad, r_pad, e_pad), features_dtype),
                jax.ShapeDtypeStruct((b_pad, e_pad), jnp.float32),
            ),
            grid_spec=pltpu.PrefetchScalarGridSpec(
                num_scalar_prefetch=0,
                grid=grid,
                in_specs=[
                    pl.BlockSpec((tb, r_pad, d_pad), lambda i: (i, 0, 0)),   # images
                    pl.BlockSpec((d_pad, e_pad), lambda i: (0, 0), **pm),    # weight
                    pl.BlockSpec((1, e_pad), lambda i: (0, 0), **pm),        # bias
                ],
                out_specs=[
                    pl.BlockSpec((tb, r_pad, e_pad), lambda i: (i, 0, 0)),
                    pl.BlockSpec((tb, e_pad), lambda i: (i, 0)),
                ],
            ),
            compiler_params=pltpu.CompilerParams(
                dimension_semantics=("parallel",),
                vmem_limit_bytes=vmem_limit),
        )

    try:
        features, features_mean = make_call(True)(x, w_t, b2)
    except Exception:
        # pipeline_mode=pl.Buffered(1) unsupported -> default double-buffering.
        features, features_mean = make_call(False)(x, w_t, b2)

    # Slice only when padding was actually added (slicing a padded array costs
    # a full extra HBM pass over the largest tensor).
    if (b_pad, r_pad, e_pad) != (B, R, E):
        features = features[:B, :R, :E]
    if (b_pad, e_pad) != (B, E):
        features_mean = features_mean[:B, :E]
    return features, features_mean


if __name__ == "__main__":
    # Small shapes consistent with the module: batch=2, regions=8, img_dim=32, embed=32.
    B, R, IMG_DIM, EMBED = 2, 8, 32, 32

    key = jax.random.PRNGKey(0)
    k_img, k_w = jax.random.split(key)
    images = jax.random.normal(k_img, (B, R, IMG_DIM), dtype=jnp.float32)

    # Xavier init mirroring init_weights(): uniform(-r, r), bias = 0.
    r = jnp.sqrt(6.0) / jnp.sqrt(IMG_DIM + EMBED)
    weight = jax.random.uniform(k_w, (EMBED, IMG_DIM), minval=-r, maxval=r,
                                dtype=jnp.float32)
    bias = jnp.zeros((EMBED,), dtype=jnp.float32)

    features, features_mean = encoder_image_precomp(images, weight, bias)
    jax.block_until_ready((features, features_mean))
    assert features.shape == (B, R, EMBED) and features_mean.shape == (B, EMBED)

    # Reference in plain JAX (f32 math over the same bf16-rounded matmul operands).
    x_c = images.astype(jnp.bfloat16).astype(jnp.float32)
    w_c = weight.astype(jnp.bfloat16).astype(jnp.float32)
    f_ref = jnp.einsum("brd,ed->bre", x_c, w_c,
                       precision=jax.lax.Precision.HIGHEST) + bias
    mean_ref = jnp.mean(f_ref, axis=1)
    nrm = jnp.sqrt(jnp.sum(f_ref ** 2, axis=-1, keepdims=True) + 1e-8) + 1e-8
    f_ref_norm = f_ref / nrm

    assert jnp.allclose(features, f_ref_norm, atol=1e-4, rtol=1e-4), \
        float(jnp.max(jnp.abs(features - f_ref_norm)))
    assert jnp.allclose(features_mean, mean_ref, atol=1e-4, rtol=1e-4), \
        float(jnp.max(jnp.abs(features_mean - mean_ref)))

    # no_imgnorm path.
    feats_nn, mean_nn = encoder_image_precomp(images, weight, bias, no_imgnorm=True)
    jax.block_until_ready((feats_nn, mean_nn))
    assert jnp.allclose(feats_nn, f_ref, atol=1e-4, rtol=1e-4)
    assert jnp.allclose(mean_nn, mean_ref, atol=1e-4, rtol=1e-4)

    # Fully-aligned path: no wrapper pad/cast/slice (B%8==0, R%8==0, D/E%128==0).
    B2, R2, D2, E2 = 16, 8, 128, 128
    k1, k2 = jax.random.split(jax.random.PRNGKey(1))
    img2 = jax.random.normal(k1, (B2, R2, D2), dtype=jnp.float32)
    w2 = jax.random.uniform(k2, (E2, D2), minval=-0.05, maxval=0.05, dtype=jnp.float32)
    bs2 = jnp.zeros((E2,), dtype=jnp.float32)
    f2, m2 = encoder_image_precomp(img2, w2, bs2)
    jax.block_until_ready((f2, m2))
    x2c = img2.astype(jnp.bfloat16).astype(jnp.float32)
    w2c = w2.astype(jnp.bfloat16).astype(jnp.float32)
    f2_ref = jnp.einsum("brd,ed->bre", x2c, w2c,
                        precision=jax.lax.Precision.HIGHEST) + bs2
    m2_ref = jnp.mean(f2_ref, axis=1)
    f2_refn = f2_ref / (jnp.sqrt(jnp.sum(f2_ref ** 2, -1, keepdims=True) + 1e-8) + 1e-8)
    assert f2.shape == (B2, R2, E2) and m2.shape == (B2, E2)
    assert jnp.allclose(f2, f2_refn, atol=1e-4, rtol=1e-4)
    assert jnp.allclose(m2, m2_ref, atol=1e-4, rtol=1e-4)

    print("KERNEL_OK")
</pallas_src>

<mosaic_0001>
module attributes {stable_mosaic.version = 11 : i64} {
  func.func @_encoder_kernel(%arg0: i32, %arg1: memref<8x8x128xbf16, #tpu.memory_space<vmem>>, %arg2: memref<128x128xbf16, #tpu.memory_space<vmem>>, %arg3: memref<1x128xf32, #tpu.memory_space<vmem>>, %arg4: memref<8x8x128xf32, #tpu.memory_space<vmem>>, %arg5: memref<8x128xf32, #tpu.memory_space<vmem>>) attributes {dimension_semantics = [#tpu.dimension_semantics<parallel>], iteration_bounds = array<i64: 1>, scalar_prefetch = 0 : i64, scratch_operands = 0 : i64, tpu.core_type = #tpu.core_type<tc>, window_params = [{transform_indices = @transform_0, window_bounds = array<i64: 8, 8, 128>}, {pipeline_mode = #tpu.pipeline_mode<synchronous>, transform_indices = @transform_1, window_bounds = array<i64: 128, 128>}, {pipeline_mode = #tpu.pipeline_mode<synchronous>, transform_indices = @transform_2, window_bounds = array<i64: 1, 128>}, {transform_indices = @transform_3, window_bounds = array<i64: 8, 8, 128>}, {transform_indices = @transform_4, window_bounds = array<i64: 8, 128>}]} {
    %c0 = arith.constant 0 : index
    %c0_0 = arith.constant 0 : index
    %c0_1 = arith.constant 0 : index
    %0 = vector.load %arg1[%c0, %c0_0, %c0_1] : memref<8x8x128xbf16, #tpu.memory_space<vmem>>, vector<8x8x128xbf16>
    %1 = vector.shape_cast %0 : vector<8x8x128xbf16> to vector<64x128xbf16>
    %c0_2 = arith.constant 0 : index
    %c0_3 = arith.constant 0 : index
    %2 = vector.load %arg2[%c0_2, %c0_3] : memref<128x128xbf16, #tpu.memory_space<vmem>>, vector<128x128xbf16>
    %cst = arith.constant dense<0.000000e+00> : vector<64x128xf32>
    %3 = tpu.matmul %1, %2, %cst {dimension_numbers = #tpu.dot_dimension_numbers<[1], [0], [0], [1], [0, 0, 1, 1], [], []>} : vector<64x128xbf16>, vector<128x128xbf16>, vector<64x128xf32> -> vector<64x128xf32>
    %4 = vector.shape_cast %3 : vector<64x128xf32> to vector<8x8x128xf32>
    %c0_4 = arith.constant 0 : index
    %c0_5 = arith.constant 0 : index
    %5 = vector.load %arg3[%c0_4, %c0_5] : memref<1x128xf32, #tpu.memory_space<vmem>>, vector<1x128xf32>
    %cst_6 = arith.constant dense<0.000000e+00> : vector<8x128xf32>
    %6 = vector.multi_reduction <add>, %4, %cst_6 [1] : vector<8x8x128xf32> to vector<8x128xf32>
    %cst_7 = arith.constant 1.250000e-01 : f32
    %7 = vector.broadcast %cst_7 : f32 to vector<8x128xf32>
    %8 = arith.mulf %6, %7 : vector<8x128xf32>
    %9 = vector.broadcast %5 : vector<1x128xf32> to vector<8x128xf32>
    %10 = arith.addf %8, %9 : vector<8x128xf32>
    %c0_8 = arith.constant 0 : index
    %c0_9 = arith.constant 0 : index
    %11 = vector.load %arg5[%c0_8, %c0_9] : memref<8x128xf32, #tpu.memory_space<vmem>>, vector<8x128xf32>
    tpu.vector_store %arg5[%c0_8, %c0_9], %10 {strides = array<i32>} : memref<8x128xf32, #tpu.memory_space<vmem>>, vector<8x128xf32>,
    %12 = vector.shape_cast %5 : vector<1x128xf32> to vector<1x1x128xf32>
    %13 = vector.broadcast %12 : vector<1x1x128xf32> to vector<8x8x128xf32>
    %14 = arith.addf %4, %13 : vector<8x8x128xf32>
    %15 = arith.mulf %14, %14 : vector<8x8x128xf32>
    %cst_10 = arith.constant dense<0.000000e+00> : vector<8x8xf32>
    %16 = vector.multi_reduction <add>, %15, %cst_10 [2] : vector<8x8x128xf32> to vector<8x8xf32>
    %17 = vector.shape_cast %16 : vector<8x8xf32> to vector<8x8x1xf32>
    %cst_11 = arith.constant 9.99999993E-9 : f32
    %18 = vector.broadcast %cst_11 : f32 to vector<8x8x1xf32>
    %19 = arith.addf %17, %18 : vector<8x8x1xf32>
    %20 = math.rsqrt %19 : vector<8x8x1xf32>
    %21 = vector.broadcast %20 : vector<8x8x1xf32> to vector<8x8x128xf32>
    %22 = arith.mulf %14, %21 : vector<8x8x128xf32>
    %c0_12 = arith.constant 0 : index
    %c0_13 = arith.constant 0 : index
    %c0_14 = arith.constant 0 : index
    %23 = vector.load %arg4[%c0_12, %c0_13, %c0_14] : memref<8x8x128xf32, #tpu.memory_space<vmem>>, vector<8x8x128xf32>
    tpu.vector_store %arg4[%c0_12, %c0_13, %c0_14], %22 {strides = array<i32>} : memref<8x8x128xf32, #tpu.memory_space<vmem>>, vector<8x8x128xf32>,
    return
  }
  func.func @transform_0(%arg0: i32) -> (i32, i32, i32) {
    %c0_i32 = arith.constant 0 : i32
    %c0_i32_0 = arith.constant 0 : i32
    %c0_i32_1 = arith.constant 0 : i32
    return %arg0, %c0_i32, %c0_i32_0 : i32, i32, i32
  }
  func.func @transform_1(%arg0: i32) -> (i32, i32) {
    %c0_i32 = arith.constant 0 : i32
    %c0_i32_0 = arith.constant 0 : i32
    %c0_i32_1 = arith.constant 0 : i32
    return %c0_i32, %c0_i32_0 : i32, i32
  }
  func.func @transform_2(%arg0: i32) -> (i32, i32) {
    %c0_i32 = arith.constant 0 : i32
    %c0_i32_0 = arith.constant 0 : i32
    %c0_i32_1 = arith.constant 0 : i32
    return %c0_i32, %c0_i32_0 : i32, i32
  }
  func.func @transform_3(%arg0: i32) -> (i32, i32, i32) {
    %c0_i32 = arith.constant 0 : i32
    %c0_i32_0 = arith.constant 0 : i32
    %c0_i32_1 = arith.constant 0 : i32
    return %arg0, %c0_i32, %c0_i32_0 : i32, i32, i32
  }
  func.func @transform_4(%arg0: i32) -> (i32, i32) {
    %c0_i32 = arith.constant 0 : i32
    %c0_i32_0 = arith.constant 0 : i32
    return %arg0, %c0_i32 : i32, i32
  }
}

module attributes {stable_mosaic.version = 11 : i64} {
  func.func @_encoder_kernel(%arg0: i32, %arg1: memref<8x8x128xbf16, #tpu.memory_space<vmem>>, %arg2: memref<128x128xbf16, #tpu.memory_space<vmem>>, %arg3: memref<1x128xf32, #tpu.memory_space<vmem>>, %arg4: memref<8x8x128xf32, #tpu.memory_space<vmem>>, %arg5: memref<8x128xf32, #tpu.memory_space<vmem>>) attributes {dimension_semantics = [#tpu.dimension_semantics<parallel>], iteration_bounds = array<i64: 1>, scalar_prefetch = 0 : i64, scratch_operands = 0 : i64, tpu.core_type = #tpu.core_type<tc>, window_params = [{transform_indices = @transform_0, window_bounds = array<i64: 8, 8, 128>}, {pipeline_mode = #tpu.pipeline_mode<synchronous>, transform_indices = @transform_1, window_bounds = array<i64: 128, 128>}, {pipeline_mode = #tpu.pipeline_mode<synchronous>, transform_indices = @transform_2, window_bounds = array<i64: 1, 128>}, {transform_indices = @transform_3, window_bounds = array<i64: 8, 8, 128>}, {transform_indices = @transform_4, window_bounds = array<i64: 8, 128>}]} {
    %c0 = arith.constant 0 : index
    %c0_0 = arith.constant 0 : index
    %c0_1 = arith.constant 0 : index
    %0 = vector.load %arg1[%c0, %c0_0, %c0_1] : memref<8x8x128xbf16, #tpu.memory_space<vmem>>, vector<8x8x128xbf16>
    %1 = vector.shape_cast %0 : vector<8x8x128xbf16> to vector<64x128xbf16>
    %c0_2 = arith.constant 0 : index
    %c0_3 = arith.constant 0 : index
    %2 = vector.load %arg2[%c0_2, %c0_3] : memref<128x128xbf16, #tpu.memory_space<vmem>>, vector<128x128xbf16>
    %cst = arith.constant dense<0.000000e+00> : vector<64x128xf32>
    %3 = tpu.matmul %1, %2, %cst {dimension_numbers = #tpu.dot_dimension_numbers<[1], [0], [0], [1], [0, 0, 1, 1], [], []>} : vector<64x128xbf16>, vector<128x128xbf16>, vector<64x128xf32> -> vector<64x128xf32>
    %4 = vector.shape_cast %3 : vector<64x128xf32> to vector<8x8x128xf32>
    %c0_4 = arith.constant 0 : index
    %c0_5 = arith.constant 0 : index
    %5 = vector.load %arg3[%c0_4, %c0_5] : memref<1x128xf32, #tpu.memory_space<vmem>>, vector<1x128xf32>
    %cst_6 = arith.constant dense<0.000000e+00> : vector<8x128xf32>
    %6 = vector.multi_reduction <add>, %4, %cst_6 [1] : vector<8x8x128xf32> to vector<8x128xf32>
    %cst_7 = arith.constant 1.250000e-01 : f32
    %7 = vector.broadcast %cst_7 : f32 to vector<8x128xf32>
    %8 = arith.mulf %6, %7 : vector<8x128xf32>
    %9 = vector.broadcast %5 : vector<1x128xf32> to vector<8x128xf32>
    %10 = arith.addf %8, %9 : vector<8x128xf32>
    %c0_8 = arith.constant 0 : index
    %c0_9 = arith.constant 0 : index
    %11 = vector.load %arg5[%c0_8, %c0_9] : memref<8x128xf32, #tpu.memory_space<vmem>>, vector<8x128xf32>
    tpu.vector_store %arg5[%c0_8, %c0_9], %10 {strides = array<i32>} : memref<8x128xf32, #tpu.memory_space<vmem>>, vector<8x128xf32>,
    %12 = vector.shape_cast %5 : vector<1x128xf32> to vector<1x1x128xf32>
    %13 = vector.broadcast %12 : vector<1x1x128xf32> to vector<8x8x128xf32>
    %14 = arith.addf %4, %13 : vector<8x8x128xf32>
    %15 = arith.mulf %14, %14 : vector<8x8x128xf32>
    %cst_10 = arith.constant dense<0.000000e+00> : vector<8x8xf32>
    %16 = vector.multi_reduction <add>, %15, %cst_10 [2] : vector<8x8x128xf32> to vector<8x8xf32>
    %17 = vector.shape_cast %16 : vector<8x8xf32> to vector<8x8x1xf32>
    %cst_11 = arith.constant 9.99999993E-9 : f32
    %18 = vector.broadcast %cst_11 : f32 to vector<8x8x1xf32>
    %19 = arith.addf %17, %18 : vector<8x8x1xf32>
    %20 = math.rsqrt %19 : vector<8x8x1xf32>
    %21 = vector.broadcast %20 : vector<8x8x1xf32> to vector<8x8x128xf32>
    %22 = arith.mulf %14, %21 : vector<8x8x128xf32>
    %c0_12 = arith.constant 0 : index
    %c0_13 = arith.constant 0 : index
    %c0_14 = arith.constant 0 : index
    %23 = vector.load %arg4[%c0_12, %c0_13, %c0_14] : memref<8x8x128xf32, #tpu.memory_space<vmem>>, vector<8x8x128xf32>
    tpu.vector_store %arg4[%c0_12, %c0_13, %c0_14], %22 {strides = array<i32>} : memref<8x8x128xf32, #tpu.memory_space<vmem>>, vector<8x8x128xf32>,
    return
  }
  func.func @transform_0(%arg0: i32) -> (i32, i32, i32) {
    %c0_i32 = arith.constant 0 : i32
    %c0_i32_0 = arith.constant 0 : i32
    %c0_i32_1 = arith.constant 0 : i32
    return %arg0, %c0_i32, %c0_i32_0 : i32, i32, i32
  }
  func.func @transform_1(%arg0: i32) -> (i32, i32) {
    %c0_i32 = arith.constant 0 : i32
    %c0_i32_0 = arith.constant 0 : i32
    %c0_i32_1 = arith.constant 0 : i32
    return %c0_i32, %c0_i32_0 : i32, i32
  }
  func.func @transform_2(%arg0: i32) -> (i32, i32) {
    %c0_i32 = arith.constant 0 : i32
    %c0_i32_0 = arith.constant 0 : i32
    %c0_i32_1 = arith.constant 0 : i32
    return %c0_i32, %c0_i32_0 : i32, i32
  }
  func.func @transform_3(%arg0: i32) -> (i32, i32, i32) {
    %c0_i32 = arith.constant 0 : i32
    %c0_i32_0 = arith.constant 0 : i32
    %c0_i32_1 = arith.constant 0 : i32
    return %arg0, %c0_i32, %c0_i32_0 : i32, i32, i32
  }
  func.func @transform_4(%arg0: i32) -> (i32, i32) {
    %c0_i32 = arith.constant 0 : i32
    %c0_i32_0 = arith.constant 0 : i32
    return %arg0, %c0_i32 : i32, i32
  }
}

</mosaic_0001>

<llo_original>
// kernel: tpu_custom_call.1
$region0: #{tpu_custom_call.1}
  #allocation0 [shape = 'u32[]', space=smem, size = 0x4, offset = 0x4, fixed_abs, tag = 'smem constant byte address 0x4 - core index']
  #allocation1 [shape = 'u32[144,128]{1,0:T(1,128)}', space=vmem, size = 0x12000, scoped, tag = 'internal scratch']
  %s0 = inlined_call_operand.hbm [shape: bf16[8,8,128], index: 0, kind: input, shape index: {}]
  %s1 = inlined_call_operand.hbm [shape: bf16[128,128], index: 1, kind: input, shape index: {}]
  %s2 = inlined_call_operand.vmem [shape: f32[1,128], index: 2, kind: input, shape index: {}]
  %s3 = inlined_call_operand.hbm [shape: f32[8,8,128], index: 3, kind: output, shape index: {0}]
  %s4 = inlined_call_operand.hbm [shape: f32[8,128], index: 4, kind: output, shape index: {1}]
  %5 = xla_tuple %s3, %s4
  %s6 = sld [smem:[#allocation0]]
  $region38: #{tpu_custom_call.1} parent=0
    _
  %s8 = ssub.s32 1, %s6
  %s9 = scalar_select 0, %s8, %s6
  $region1: #{tpu_custom_call.1} parent=0
    #allocation2 [shape = 'u8[16384]{0}', space=vmem, size = 0x4000, scoped, tag = 'input window, operand 0, single buffered']
    #allocation3 [shape = 's32[1]{0}', space=sflag, size = 0x4, scoped, tag = 'scoped memory for tpu_custom_call.1']
    #allocation4 [shape = 's32[1]{0}', space=sflag, size = 0x4, scoped, tag = 'scoped memory for tpu_custom_call.1']
    #allocation5 [shape = 'u8[32768]{0}', space=vmem, size = 0x8000, scoped, tag = 'input window, operand 1, single buffered']
    #allocation6 [shape = 's32[1]{0}', space=sflag, size = 0x4, scoped, tag = 'scoped memory for tpu_custom_call.1']
    #allocation7 [shape = 'u8[32768]{0}', space=vmem, size = 0x8000, scoped, tag = 'output window, operand 0, single buffered']
    #allocation8 [shape = 'u8[4096]{0}', space=vmem, size = 0x1000, scoped, tag = 'output window, operand 1, single buffered']
    #allocation9 [shape = 's32[1]{0}', space=sflag, size = 0x4, scoped, tag = 'scoped memory for tpu_custom_call.1']
    %10 = vsyncpa [#allocation3], 0
    %11 = vsyncpa [#allocation6], 0
    %12 = vsyncpa [#allocation4], 0
    %13 = vsyncpa [#allocation9], 0
    // Predicated region
    $region2: #{tpu_custom_call.1} parent=1 // pred_check
      _
    $region3: #{tpu_custom_call.1} parent=1 // pred_check_branch
      %15 = sbr.rel (0) target = $region5
    $region4: #{tpu_custom_call.1} parent=1 // pred_region
      %s17 = ssub.s32 512, 512
      %18 = vsyncadd [#allocation3], %s17
      %s19 = sshll.u32 [#allocation2], 4
      %s20 = int_to_ptr.vmem [resolvable:$true] %s19
      %25 = dma.hbm_to_vmem [thread:$0]  %s0, 512, %s20, [#allocation3], 64, 64, 4
    $region5: #{tpu_custom_call.1} parent=1 // pred_fallthru
      _
    // Predicated region
    $region6: #{tpu_custom_call.1} parent=1 // pred_check
      _
    $region7: #{tpu_custom_call.1} parent=1 // pred_check_branch
      %27 = sbr.rel (0) target = $region9
    $region8: #{tpu_custom_call.1} parent=1 // pred_region
      %s29 = ssub.s32 1024, 1024
      %30 = vsyncadd [#allocation6], %s29
      %s31 = sshll.u32 [#allocation5], 4
      %s32 = int_to_ptr.vmem [resolvable:$true] %s31
      %37 = dma.hbm_to_vmem [thread:$0]  %s1, 1024, %s32, [#allocation6], 64, 64, 4
    $region9: #{tpu_custom_call.1} parent=1 // pred_fallthru
      _
    // Predicated region
    $region10: #{tpu_custom_call.1} parent=1 // pred_check
      _
    $region11: #{tpu_custom_call.1} parent=1 // pred_check_branch
      %39 = sbr.rel (0) target = $region13
    $region12: #{tpu_custom_call.1} parent=1 // pred_region
      _
    $region13: #{tpu_custom_call.1} parent=1 // pred_fallthru
      _
    // Predicated region
    $region14: #{tpu_custom_call.1} parent=1 // pred_check
      _
    $region15: #{tpu_custom_call.1} parent=1 // pred_check_branch
      %41 = sbr.rel (0) target = $region17
    $region16: #{tpu_custom_call.1} parent=1 // pred_region
      %42 = dma.done [#allocation3], 512
    $region17: #{tpu_custom_call.1} parent=1 // pred_fallthru
      _
    // Predicated region
    $region18: #{tpu_custom_call.1} parent=1 // pred_check
      _
    $region19: #{tpu_custom_call.1} parent=1 // pred_check_branch
      %44 = sbr.rel (0) target = $region21
    $region20: #{tpu_custom_call.1} parent=1 // pred_region
      %45 = dma.done [#allocation6], 1024
    $region21: #{tpu_custom_call.1} parent=1 // pred_fallthru
      _
    %v47 = vld [vmem:[#allocation2] sm:$0xf]
    %v48 = vld [vmem:[#allocation2 + $0x4] sm:$0xf]
    %v49 = vld [vmem:[#allocation2 + $0x8] sm:$0xf]
    %v50 = vld [vmem:[#allocation2 + $0xc] sm:$0xf]
    %v51 = vld [vmem:[#allocation2 + $0x10] sm:$0xf]
    %v52 = vld [vmem:[#allocation2 + $0x14] sm:$0xf]
    %v53 = vld [vmem:[#allocation2 + $0x18] sm:$0xf]
    %v54 = vld [vmem:[#allocation2 + $0x1c] sm:$0xf]
    %v55 = vld [vmem:[#allocation5] sm:$0xf]
    %v56 = vld [vmem:[#allocation5 + $0x4] sm:$0xf]
    %v57 = vld [vmem:[#allocation5 + $0x8] sm:$0xf]
    %v58 = vld [vmem:[#allocation5 + $0xc] sm:$0xf]
    %v59 = vld [vmem:[#allocation5 + $0x10] sm:$0xf]
    %v60 = vld [vmem:[#allocation5 + $0x14] sm:$0xf]
    %v61 = vld [vmem:[#allocation5 + $0x18] sm:$0xf]
    %v62 = vld [vmem:[#allocation5 + $0x1c] sm:$0xf]
    %v63 = vld [vmem:[#allocation5 + $0x20] sm:$0xf]
    %v64 = vld [vmem:[#allocation5 + $0x24] sm:$0xf]
    %v65 = vld [vmem:[#allocation5 + $0x28] sm:$0xf]
    %v66 = vld [vmem:[#allocation5 + $0x2c] sm:$0xf]
    %v67 = vld [vmem:[#allocation5 + $0x30] sm:$0xf]
    %v68 = vld [vmem:[#allocation5 + $0x34] sm:$0xf]
    %v69 = vld [vmem:[#allocation5 + $0x38] sm:$0xf]
    %v70 = vld [vmem:[#allocation5 + $0x3c] sm:$0xf]
    %v79 = vunpack.c.l.b16 %v47
    %v80 = vunpack.c.l.b16 %v48
    %v81 = vunpack.c.l.b16 %v49
    %v82 = vunpack.c.l.b16 %v50
    %v83 = vunpack.c.l.b16 %v51
    %v84 = vunpack.c.l.b16 %v52
    %v85 = vunpack.c.l.b16 %v53
    %v86 = vunpack.c.l.b16 %v54
    %v87 = vpack.c.b16 %v80, %v79
    %v88 = vpack.c.b16 %v82, %v81
    %v89 = vpack.c.b16 %v84, %v83
    %v90 = vpack.c.b16 %v86, %v85
    %v111 = vunpack.c.l.b16 %v55
    %v112 = vunpack.c.l.b16 %v56
    %v113 = vunpack.c.l.b16 %v57
    %v114 = vunpack.c.l.b16 %v58
    %v115 = vunpack.c.l.b16 %v59
    %v116 = vunpack.c.l.b16 %v60
    %v117 = vunpack.c.l.b16 %v61
    %v118 = vunpack.c.l.b16 %v62
    %v119 = vunpack.c.l.b16 %v63
    %v120 = vunpack.c.l.b16 %v64
    %v121 = vunpack.c.l.b16 %v65
    %v122 = vunpack.c.l.b16 %v66
    %v123 = vunpack.c.l.b16 %v67
    %v124 = vunpack.c.l.b16 %v68
    %v125 = vunpack.c.l.b16 %v69
    %v126 = vunpack.c.l.b16 %v70
    %v127 = vpack.c.b16 %v112, %v111
    %v128 = vpack.c.b16 %v114, %v113
    %v129 = vpack.c.b16 %v116, %v115
    %v130 = vpack.c.b16 %v118, %v117
    %v131 = vpack.c.b16 %v120, %v119
    %v132 = vpack.c.b16 %v122, %v121
    %v133 = vpack.c.b16 %v124, %v123
    %v134 = vpack.c.b16 %v126, %v125
    %143 = vmatprep.subr.bf16.mxu0 0
    %144 = vmatpush1.bf16.msra.mxu0 %v127
    %145 = vmatprep.subr.bf16.mxu0 0
    %146 = vmatpush1.bf16.msra.mxu0 %v128
    %147 = vmatprep.subr.bf16.mxu0 0
    %148 = vmatpush1.bf16.msra.mxu0 %v129
    %149 = vmatprep.subr.bf16.mxu0 0
    %150 = vmatpush1.bf16.msra.mxu0 %v130
    %151 = vmatprep.subr.bf16.mxu0 0
    %152 = vmatpush1.bf16.msra.mxu0 %v131
    %153 = vmatprep.subr.bf16.mxu0 0
    %154 = vmatpush1.bf16.msra.mxu0 %v132
    %155 = vmatprep.subr.bf16.mxu0 0
    %156 = vmatpush1.bf16.msra.mxu0 %v133
    %157 = vmatprep.subr.bf16.mxu0 0
    %158 = vmatpush1.bf16.msra.mxu0 %v134
    %159 = vmatprep.subr.bf16.mxu0 0
    %160 = vmatpush1.bf16.msra.mxu0 0
    %161 = vmatprep.subr.bf16.mxu0 0
    %162 = vmatpush1.bf16.msra.mxu0 0
    %163 = vmatprep.subr.bf16.mxu0 0
    %164 = vmatpush1.bf16.msra.mxu0 0
    %165 = vmatprep.subr.bf16.mxu0 0
    %166 = vmatpush1.bf16.msra.mxu0 0
    %167 = vmatprep.subr.bf16.mxu0 0
    %168 = vmatpush1.bf16.msra.mxu0 0
    %169 = vmatprep.subr.bf16.mxu0 0
    %170 = vmatpush1.bf16.msra.mxu0 0
    %171 = vmatprep.subr.bf16.mxu0 0
    %172 = vmatpush1.bf16.msra.mxu0 0
    %173 = vmatprep.subr.bf16.mxu0 0
    %174 = vmatpush1.bf16.msra.mxu0 0
    %175 = vmatprep.mubr.bf16.mxu0 0
    %176 = vmatmul.mubr.bf16.gmra.mrb[0].mxu0 %v87
    %v177 = vpop.f32.mrb[0].mxu0
    %v178 = vadd.f32 0.0, %v177
    %v179 = vpop.f32.mrb[0].mxu0
    %v180 = vpop.f32.mrb[0].mxu0
    %v181 = vadd.f32 0.0, %v180
    %v182 = vpop.f32.mrb[0].mxu0
    %183 = vmatprep.mubr.bf16.mxu0 0
    %184 = vmatmul.mubr.bf16.gmra.mrb[0].mxu0 %v88
    %v185 = vpop.f32.mrb[0].mxu0
    %v186 = vadd.f32 0.0, %v185
    %v187 = vpop.f32.mrb[0].mxu0
    %v188 = vpop.f32.mrb[0].mxu0
    %v189 = vadd.f32 0.0, %v188
    %v190 = vpop.f32.mrb[0].mxu0
    %191 = vmatprep.mubr.bf16.mxu0 0
    %192 = vmatmul.mubr.bf16.gmra.mrb[0].mxu0 %v89
    %v193 = vpop.f32.mrb[0].mxu0
    %v194 = vadd.f32 0.0, %v193
    %v195 = vpop.f32.mrb[0].mxu0
    %v196 = vpop.f32.mrb[0].mxu0
    %v197 = vadd.f32 0.0, %v196
    %v198 = vpop.f32.mrb[0].mxu0
    %199 = vmatprep.mubr.bf16.mxu0 0
    %200 = vmatmul.mubr.bf16.gmra.mrb[0].mxu0 %v90
    %v201 = vpop.f32.mrb[0].mxu0
    %v202 = vadd.f32 0.0, %v201
    %v203 = vpop.f32.mrb[0].mxu0
    %v204 = vpop.f32.mrb[0].mxu0
    %v205 = vadd.f32 0.0, %v204
    %v206 = vpop.f32.mrb[0].mxu0
    %207 = vdwg.mxu0
    %v208 = vld [vmem:[%s2] sm:$0x1]
    %v209 = vrot.slane %v178, 4
    %v210 = vadd.f32 %v178, %v209
    %v211 = vrot.slane %v210, 2
    %v212 = vadd.f32 %v210, %v211
    %v213 = vrot.slane %v212, 1
    %v214 = vadd.f32 %v212, %v213
    %v215 = vrot.slane %v181, 4
    %v216 = vadd.f32 %v181, %v215
    %v217 = vrot.slane %v216, 2
    %v218 = vadd.f32 %v216, %v217
    %v219 = vrot.slane %v218, 1
    %v220 = vadd.f32 %v218, %v219
    %v221 = vrot.slane %v186, 4
    %v222 = vadd.f32 %v186, %v221
    %v223 = vrot.slane %v222, 2
    %v224 = vadd.f32 %v222, %v223
    %v225 = vrot.slane %v224, 1
    %v226 = vadd.f32 %v224, %v225
    %v227 = vrot.slane %v189, 4
    %v228 = vadd.f32 %v189, %v227
    %v229 = vrot.slane %v228, 2
    %v230 = vadd.f32 %v228, %v229
    %v231 = vrot.slane %v230, 1
    %v232 = vadd.f32 %v230, %v231
    %v233 = vrot.slane %v194, 4
    %v234 = vadd.f32 %v194, %v233
    %v235 = vrot.slane %v234, 2
    %v236 = vadd.f32 %v234, %v235
    %v237 = vrot.slane %v236, 1
    %v238 = vadd.f32 %v236, %v237
    %v239 = vrot.slane %v197, 4
    %v240 = vadd.f32 %v197, %v239
    %v241 = vrot.slane %v240, 2
    %v242 = vadd.f32 %v240, %v241
    %v243 = vrot.slane %v242, 1
    %v244 = vadd.f32 %v242, %v243
    %v245 = vrot.slane %v202, 4
    %v246 = vadd.f32 %v202, %v245
    %v247 = vrot.slane %v246, 2
    %v248 = vadd.f32 %v246, %v247
    %v249 = vrot.slane %v248, 1
    %v250 = vadd.f32 %v248, %v249
    %v251 = vrot.slane %v205, 4
    %v252 = vadd.f32 %v205, %v251
    %v253 = vrot.slane %v252, 2
    %v254 = vadd.f32 %v252, %v253
    %v255 = vrot.slane %v254, 1
    %v256 = vadd.f32 %v254, %v255
    %v257 = vmul.f32 %v214, 0.125
    %v258 = vmul.f32 %v220, 0.125
    %v259 = vmul.f32 %v226, 0.125
    %v260 = vmul.f32 %v232, 0.125
    %v261 = vmul.f32 %v238, 0.125
    %v262 = vmul.f32 %v244, 0.125
    %v263 = vmul.f32 %v250, 0.125
    %v264 = vmul.f32 %v256, 0.125
    %v266 = vlaneseq
    %v267 = vshrl.u32 %v266, 7
    %v268 = vsub.s32 0, %v267
    %v269 = vrot.slane %v208, %v268
    %v271 = vadd.f32 %v257, %v269
    %v272 = vadd.f32 %v258, %v269
    %v273 = vadd.f32 %v259, %v269
    %v274 = vadd.f32 %v260, %v269
    %v275 = vadd.f32 %v261, %v269
    %v276 = vadd.f32 %v262, %v269
    %v277 = vadd.f32 %v263, %v269
    %v278 = vadd.f32 %v264, %v269
    %v287 = vrot.slane %v272, 7
    %vm288 = vcmask 1041409
    %v289 = vsel %vm288, %v287, %v271
    %v290 = vrot.slane %v273, 6
    %vm291 = vcmask 1042434
    %v292 = vsel %vm291, %v290, %v289
    %v293 = vrot.slane %v274, 5
    %vm294 = vcmask 1043459
    %v295 = vsel %vm294, %v293, %v292
    %v296 = vrot.slane %v275, 4
    %vm297 = vcmask 1044484
    %v298 = vsel %vm297, %v296, %v295
    %v299 = vrot.slane %v276, 3
    %vm300 = vcmask 1045509
    %v301 = vsel %vm300, %v299, %v298
    %v302 = vrot.slane %v277, 2
    %vm303 = vcmask 1046534
    %v304 = vsel %vm303, %v302, %v301
    %v305 = vrot.slane %v278, 1
    %vm306 = vcmask 1047559
    %v307 = vsel %vm306, %v305, %v304
    %309 = vst [vmem:[#allocation8] sm:$0xff] %v307
    %v310 = vadd.f32 %v178, %v269
    %v311 = vadd.f32 %v181, %v269
    %v312 = vadd.f32 %v186, %v269
    %v313 = vadd.f32 %v189, %v269
    %v314 = vadd.f32 %v194, %v269
    %v315 = vadd.f32 %v197, %v269
    %v316 = vadd.f32 %v202, %v269
    %v317 = vadd.f32 %v205, %v269
    %v318 = vmul.f32 %v310, %v310
    %v319 = vmul.f32 %v311, %v311
    %v320 = vmul.f32 %v312, %v312
    %v321 = vmul.f32 %v313, %v313
    %v322 = vmul.f32 %v314, %v314
    %v323 = vmul.f32 %v315, %v315
    %v324 = vmul.f32 %v316, %v316
    %v325 = vmul.f32 %v317, %v317
    %326 = vadd.xlane.f32.xlu0 %v318
    %v327 = vpop.xlane.xlu0 %326
    %328 = vadd.xlane.f32.xlu0 %v319
    %v329 = vpop.xlane.xlu0 %328
    %330 = vadd.xlane.f32.xlu0 %v320
    %v331 = vpop.xlane.xlu0 %330
    %332 = vadd.xlane.f32.xlu0 %v321
    %v333 = vpop.xlane.xlu0 %332
    %334 = vadd.xlane.f32.xlu0 %v322
    %v335 = vpop.xlane.xlu0 %334
    %336 = vadd.xlane.f32.xlu0 %v323
    %v337 = vpop.xlane.xlu0 %336
    %338 = vadd.xlane.f32.xlu0 %v324
    %v339 = vpop.xlane.xlu0 %338
    %340 = vadd.xlane.f32.xlu0 %v325
    %v341 = vpop.xlane.xlu0 %340
    %v342 = vadd.f32 %v327, 1e-08
    %v343 = vadd.f32 %v329, 1e-08
    %v344 = vadd.f32 %v331, 1e-08
    %v345 = vadd.f32 %v333, 1e-08
    %v346 = vadd.f32 %v335, 1e-08
    %v347 = vadd.f32 %v337, 1e-08
    %v348 = vadd.f32 %v339, 1e-08
    %v349 = vadd.f32 %v341, 1e-08
    %v350 = vrsqrt.pop %v342
    %v351 = vrsqrt.pop %v343
    %v352 = vrsqrt.pop %v344
    %v353 = vrsqrt.pop %v345
    %v354 = vrsqrt.pop %v346
    %v355 = vrsqrt.pop %v347
    %v356 = vrsqrt.pop %v348
    %v357 = vrsqrt.pop %v349
    %v358 = vmul.f32 %v310, %v350
    %v359 = vmul.f32 %v311, %v351
    %v360 = vmul.f32 %v312, %v352
    %v361 = vmul.f32 %v313, %v353
    %v362 = vmul.f32 %v314, %v354
    %v363 = vmul.f32 %v315, %v355
    %v364 = vmul.f32 %v316, %v356
    %v365 = vmul.f32 %v317, %v357
    %366 = vst [vmem:[#allocation7] sm:$0xff] %v358
    %367 = vst [vmem:[#allocation7 + $0x8] sm:$0xff] %v359
    %368 = vst [vmem:[#allocation7 + $0x10] sm:$0xff] %v360
    %369 = vst [vmem:[#allocation7 + $0x18] sm:$0xff] %v361
    %370 = vst [vmem:[#allocation7 + $0x20] sm:$0xff] %v362
    %371 = vst [vmem:[#allocation7 + $0x28] sm:$0xff] %v363
    %372 = vst [vmem:[#allocation7 + $0x30] sm:$0xff] %v364
    %373 = vst [vmem:[#allocation7 + $0x38] sm:$0xff] %v365
    // Predicated region
    $region22: #{tpu_custom_call.1} parent=1 // pred_check
      _
    $region23: #{tpu_custom_call.1} parent=1 // pred_check_branch
      %375 = sbr.rel (0) target = $region25
    $region24: #{tpu_custom_call.1} parent=1 // pred_region
      %s377 = ssub.s32 1024, 1024
      %378 = vsyncadd [#allocation4], %s377
      %s379 = sshll.u32 [#allocation7], 4
      %s380 = int_to_ptr.vmem [resolvable:$true] %s379
      %385 = dma.vmem_to_hbm [thread:$0]  %s380, 1024, %s3, [#allocation4], 128, 128, 8
    $region25: #{tpu_custom_call.1} parent=1 // pred_fallthru
      _
    // Predicated region
    $region26: #{tpu_custom_call.1} parent=1 // pred_check
      _
    $region27: #{tpu_custom_call.1} parent=1 // pred_check_branch
      %387 = sbr.rel (0) target = $region29
    $region28: #{tpu_custom_call.1} parent=1 // pred_region
      %s389 = ssub.s32 128, 128
      %390 = vsyncadd [#allocation9], %s389
      %s392 = sshll.u32 [#allocation8], 4
      %s393 = int_to_ptr.vmem [resolvable:$true] %s392
      %395 = dma.vmem_to_hbm [thread:$0]  %s393, 128, %s4, [#allocation9]
    $region29: #{tpu_custom_call.1} parent=1 // pred_fallthru
      _
    // Predicated region
    $region30: #{tpu_custom_call.1} parent=1 // pred_check
      _
    $region31: #{tpu_custom_call.1} parent=1 // pred_check_branch
      %397 = sbr.rel (0) target = $region33
    $region32: #{tpu_custom_call.1} parent=1 // pred_region
      %398 = dma.done [#allocation4], 1024
    $region33: #{tpu_custom_call.1} parent=1 // pred_fallthru
      _
    // Predicated region
    $region34: #{tpu_custom_call.1} parent=1 // pred_check
      _
    $region35: #{tpu_custom_call.1} parent=1 // pred_check_branch
      %400 = sbr.rel (0) target = $region37
    $region36: #{tpu_custom_call.1} parent=1 // pred_region
      %401 = dma.done [#allocation9], 128
    $region37: #{tpu_custom_call.1} parent=1 // pred_fallthru
      _
    %402 = vsyncpa [#allocation3], 1
    %403 = vsyncpa [#allocation6], 1
    %404 = vsyncpa [#allocation4], 1
    %405 = vsyncpa [#allocation9], 1

// kernel: tpu_custom_call.1
$region0: #{tpu_custom_call.1}
  #allocation0 [shape = 'u32[]', space=smem, size = 0x4, offset = 0x4, fixed_abs, tag = 'smem constant byte address 0x4 - core index']
  #allocation1 [shape = 'u32[144,128]{1,0:T(1,128)}', space=vmem, size = 0x12000, scoped, tag = 'internal scratch']
  %s0 = inlined_call_operand.hbm [shape: bf16[8,8,128], index: 0, kind: input, shape index: {}]
  %s1 = inlined_call_operand.hbm [shape: bf16[128,128], index: 1, kind: input, shape index: {}]
  %s2 = inlined_call_operand.vmem [shape: f32[1,128], index: 2, kind: input, shape index: {}]
  %s3 = inlined_call_operand.hbm [shape: f32[8,8,128], index: 3, kind: output, shape index: {0}]
  %s4 = inlined_call_operand.hbm [shape: f32[8,128], index: 4, kind: output, shape index: {1}]
  %5 = xla_tuple %s3, %s4
  %s6 = sld [smem:[#allocation0]]
  $region38: #{tpu_custom_call.1} parent=0
    _
  %s8 = ssub.s32 1, %s6
  %s9 = scalar_select 0, %s8, %s6
  $region1: #{tpu_custom_call.1} parent=0
    #allocation2 [shape = 'u8[16384]{0}', space=vmem, size = 0x4000, scoped, tag = 'input window, operand 0, single buffered']
    #allocation3 [shape = 's32[1]{0}', space=sflag, size = 0x4, scoped, tag = 'scoped memory for tpu_custom_call.1']
    #allocation4 [shape = 's32[1]{0}', space=sflag, size = 0x4, scoped, tag = 'scoped memory for tpu_custom_call.1']
    #allocation5 [shape = 'u8[32768]{0}', space=vmem, size = 0x8000, scoped, tag = 'input window, operand 1, single buffered']
    #allocation6 [shape = 's32[1]{0}', space=sflag, size = 0x4, scoped, tag = 'scoped memory for tpu_custom_call.1']
    #allocation7 [shape = 'u8[32768]{0}', space=vmem, size = 0x8000, scoped, tag = 'output window, operand 0, single buffered']
    #allocation8 [shape = 'u8[4096]{0}', space=vmem, size = 0x1000, scoped, tag = 'output window, operand 1, single buffered']
    #allocation9 [shape = 's32[1]{0}', space=sflag, size = 0x4, scoped, tag = 'scoped memory for tpu_custom_call.1']
    %10 = vsyncpa [#allocation3], 0
    %11 = vsyncpa [#allocation6], 0
    %12 = vsyncpa [#allocation4], 0
    %13 = vsyncpa [#allocation9], 0
    // Predicated region
    $region2: #{tpu_custom_call.1} parent=1 // pred_check
      _
    $region3: #{tpu_custom_call.1} parent=1 // pred_check_branch
      %15 = sbr.rel (0) target = $region5
    $region4: #{tpu_custom_call.1} parent=1 // pred_region
      %s17 = ssub.s32 512, 512
      %18 = vsyncadd [#allocation3], %s17
      %s19 = sshll.u32 [#allocation2], 4
      %s20 = int_to_ptr.vmem [resolvable:$true] %s19
      %25 = dma.hbm_to_vmem [thread:$0]  %s0, 512, %s20, [#allocation3], 64, 64, 4
    $region5: #{tpu_custom_call.1} parent=1 // pred_fallthru
      _
    // Predicated region
    $region6: #{tpu_custom_call.1} parent=1 // pred_check
      _
    $region7: #{tpu_custom_call.1} parent=1 // pred_check_branch
      %27 = sbr.rel (0) target = $region9
    $region8: #{tpu_custom_call.1} parent=1 // pred_region
      %s29 = ssub.s32 1024, 1024
      %30 = vsyncadd [#allocation6], %s29
      %s31 = sshll.u32 [#allocation5], 4
      %s32 = int_to_ptr.vmem [resolvable:$true] %s31
      %37 = dma.hbm_to_vmem [thread:$0]  %s1, 1024, %s32, [#allocation6], 64, 64, 4
    $region9: #{tpu_custom_call.1} parent=1 // pred_fallthru
      _
    // Predicated region
    $region10: #{tpu_custom_call.1} parent=1 // pred_check
      _
    $region11: #{tpu_custom_call.1} parent=1 // pred_check_branch
      %39 = sbr.rel (0) target = $region13
    $region12: #{tpu_custom_call.1} parent=1 // pred_region
      _
    $region13: #{tpu_custom_call.1} parent=1 // pred_fallthru
      _
    // Predicated region
    $region14: #{tpu_custom_call.1} parent=1 // pred_check
      _
    $region15: #{tpu_custom_call.1} parent=1 // pred_check_branch
      %41 = sbr.rel (0) target = $region17
    $region16: #{tpu_custom_call.1} parent=1 // pred_region
      %42 = dma.done [#allocation3], 512
    $region17: #{tpu_custom_call.1} parent=1 // pred_fallthru
      _
    // Predicated region
    $region18: #{tpu_custom_call.1} parent=1 // pred_check
      _
    $region19: #{tpu_custom_call.1} parent=1 // pred_check_branch
      %44 = sbr.rel (0) target = $region21
    $region20: #{tpu_custom_call.1} parent=1 // pred_region
      %45 = dma.done [#allocation6], 1024
    $region21: #{tpu_custom_call.1} parent=1 // pred_fallthru
      _
    %v47 = vld [vmem:[#allocation2] sm:$0xf]
    %v48 = vld [vmem:[#allocation2 + $0x4] sm:$0xf]
    %v49 = vld [vmem:[#allocation2 + $0x8] sm:$0xf]
    %v50 = vld [vmem:[#allocation2 + $0xc] sm:$0xf]
    %v51 = vld [vmem:[#allocation2 + $0x10] sm:$0xf]
    %v52 = vld [vmem:[#allocation2 + $0x14] sm:$0xf]
    %v53 = vld [vmem:[#allocation2 + $0x18] sm:$0xf]
    %v54 = vld [vmem:[#allocation2 + $0x1c] sm:$0xf]
    %v55 = vld [vmem:[#allocation5] sm:$0xf]
    %v56 = vld [vmem:[#allocation5 + $0x4] sm:$0xf]
    %v57 = vld [vmem:[#allocation5 + $0x8] sm:$0xf]
    %v58 = vld [vmem:[#allocation5 + $0xc] sm:$0xf]
    %v59 = vld [vmem:[#allocation5 + $0x10] sm:$0xf]
    %v60 = vld [vmem:[#allocation5 + $0x14] sm:$0xf]
    %v61 = vld [vmem:[#allocation5 + $0x18] sm:$0xf]
    %v62 = vld [vmem:[#allocation5 + $0x1c] sm:$0xf]
    %v63 = vld [vmem:[#allocation5 + $0x20] sm:$0xf]
    %v64 = vld [vmem:[#allocation5 + $0x24] sm:$0xf]
    %v65 = vld [vmem:[#allocation5 + $0x28] sm:$0xf]
    %v66 = vld [vmem:[#allocation5 + $0x2c] sm:$0xf]
    %v67 = vld [vmem:[#allocation5 + $0x30] sm:$0xf]
    %v68 = vld [vmem:[#allocation5 + $0x34] sm:$0xf]
    %v69 = vld [vmem:[#allocation5 + $0x38] sm:$0xf]
    %v70 = vld [vmem:[#allocation5 + $0x3c] sm:$0xf]
    %v79 = vunpack.c.l.b16 %v47
    %v80 = vunpack.c.l.b16 %v48
    %v81 = vunpack.c.l.b16 %v49
    %v82 = vunpack.c.l.b16 %v50
    %v83 = vunpack.c.l.b16 %v51
    %v84 = vunpack.c.l.b16 %v52
    %v85 = vunpack.c.l.b16 %v53
    %v86 = vunpack.c.l.b16 %v54
    %v87 = vpack.c.b16 %v80, %v79
    %v88 = vpack.c.b16 %v82, %v81
    %v89 = vpack.c.b16 %v84, %v83
    %v90 = vpack.c.b16 %v86, %v85
    %v111 = vunpack.c.l.b16 %v55
    %v112 = vunpack.c.l.b16 %v56
    %v113 = vunpack.c.l.b16 %v57
    %v114 = vunpack.c.l.b16 %v58
    %v115 = vunpack.c.l.b16 %v59
    %v116 = vunpack.c.l.b16 %v60
    %v117 = vunpack.c.l.b16 %v61
    %v118 = vunpack.c.l.b16 %v62
    %v119 = vunpack.c.l.b16 %v63
    %v120 = vunpack.c.l.b16 %v64
    %v121 = vunpack.c.l.b16 %v65
    %v122 = vunpack.c.l.b16 %v66
    %v123 = vunpack.c.l.b16 %v67
    %v124 = vunpack.c.l.b16 %v68
    %v125 = vunpack.c.l.b16 %v69
    %v126 = vunpack.c.l.b16 %v70
    %v127 = vpack.c.b16 %v112, %v111
    %v128 = vpack.c.b16 %v114, %v113
    %v129 = vpack.c.b16 %v116, %v115
    %v130 = vpack.c.b16 %v118, %v117
    %v131 = vpack.c.b16 %v120, %v119
    %v132 = vpack.c.b16 %v122, %v121
    %v133 = vpack.c.b16 %v124, %v123
    %v134 = vpack.c.b16 %v126, %v125
    %143 = vmatprep.subr.bf16.mxu0 0
    %144 = vmatpush1.bf16.msra.mxu0 %v127
    %145 = vmatprep.subr.bf16.mxu0 0
    %146 = vmatpush1.bf16.msra.mxu0 %v128
    %147 = vmatprep.subr.bf16.mxu0 0
    %148 = vmatpush1.bf16.msra.mxu0 %v129
    %149 = vmatprep.subr.bf16.mxu0 0
    %150 = vmatpush1.bf16.msra.mxu0 %v130
    %151 = vmatprep.subr.bf16.mxu0 0
    %152 = vmatpush1.bf16.msra.mxu0 %v131
    %153 = vmatprep.subr.bf16.mxu0 0
    %154 = vmatpush1.bf16.msra.mxu0 %v132
    %155 = vmatprep.subr.bf16.mxu0 0
    %156 = vmatpush1.bf16.msra.mxu0 %v133
    %157 = vmatprep.subr.bf16.mxu0 0
    %158 = vmatpush1.bf16.msra.mxu0 %v134
    %159 = vmatprep.subr.bf16.mxu0 0
    %160 = vmatpush1.bf16.msra.mxu0 0
    %161 = vmatprep.subr.bf16.mxu0 0
    %162 = vmatpush1.bf16.msra.mxu0 0
    %163 = vmatprep.subr.bf16.mxu0 0
    %164 = vmatpush1.bf16.msra.mxu0 0
    %165 = vmatprep.subr.bf16.mxu0 0
    %166 = vmatpush1.bf16.msra.mxu0 0
    %167 = vmatprep.subr.bf16.mxu0 0
    %168 = vmatpush1.bf16.msra.mxu0 0
    %169 = vmatprep.subr.bf16.mxu0 0
    %170 = vmatpush1.bf16.msra.mxu0 0
    %171 = vmatprep.subr.bf16.mxu0 0
    %172 = vmatpush1.bf16.msra.mxu0 0
    %173 = vmatprep.subr.bf16.mxu0 0
    %174 = vmatpush1.bf16.msra.mxu0 0
    %175 = vmatprep.mubr.bf16.mxu0 0
    %176 = vmatmul.mubr.bf16.gmra.mrb[0].mxu0 %v87
    %v177 = vpop.f32.mrb[0].mxu0
    %v178 = vadd.f32 0.0, %v177
    %v179 = vpop.f32.mrb[0].mxu0
    %v180 = vpop.f32.mrb[0].mxu0
    %v181 = vadd.f32 0.0, %v180
    %v182 = vpop.f32.mrb[0].mxu0
    %183 = vmatprep.mubr.bf16.mxu0 0
    %184 = vmatmul.mubr.bf16.gmra.mrb[0].mxu0 %v88
    %v185 = vpop.f32.mrb[0].mxu0
    %v186 = vadd.f32 0.0, %v185
    %v187 = vpop.f32.mrb[0].mxu0
    %v188 = vpop.f32.mrb[0].mxu0
    %v189 = vadd.f32 0.0, %v188
    %v190 = vpop.f32.mrb[0].mxu0
    %191 = vmatprep.mubr.bf16.mxu0 0
    %192 = vmatmul.mubr.bf16.gmra.mrb[0].mxu0 %v89
    %v193 = vpop.f32.mrb[0].mxu0
    %v194 = vadd.f32 0.0, %v193
    %v195 = vpop.f32.mrb[0].mxu0
    %v196 = vpop.f32.mrb[0].mxu0
    %v197 = vadd.f32 0.0, %v196
    %v198 = vpop.f32.mrb[0].mxu0
    %199 = vmatprep.mubr.bf16.mxu0 0
    %200 = vmatmul.mubr.bf16.gmra.mrb[0].mxu0 %v90
    %v201 = vpop.f32.mrb[0].mxu0
    %v202 = vadd.f32 0.0, %v201
    %v203 = vpop.f32.mrb[0].mxu0
    %v204 = vpop.f32.mrb[0].mxu0
    %v205 = vadd.f32 0.0, %v204
    %v206 = vpop.f32.mrb[0].mxu0
    %207 = vdwg.mxu0
    %v208 = vld [vmem:[%s2] sm:$0x1]
    %v209 = vrot.slane %v178, 4
    %v210 = vadd.f32 %v178, %v209
    %v211 = vrot.slane %v210, 2
    %v212 = vadd.f32 %v210, %v211
    %v213 = vrot.slane %v212, 1
    %v214 = vadd.f32 %v212, %v213
    %v215 = vrot.slane %v181, 4
    %v216 = vadd.f32 %v181, %v215
    %v217 = vrot.slane %v216, 2
    %v218 = vadd.f32 %v216, %v217
    %v219 = vrot.slane %v218, 1
    %v220 = vadd.f32 %v218, %v219
    %v221 = vrot.slane %v186, 4
    %v222 = vadd.f32 %v186, %v221
    %v223 = vrot.slane %v222, 2
    %v224 = vadd.f32 %v222, %v223
    %v225 = vrot.slane %v224, 1
    %v226 = vadd.f32 %v224, %v225
    %v227 = vrot.slane %v189, 4
    %v228 = vadd.f32 %v189, %v227
    %v229 = vrot.slane %v228, 2
    %v230 = vadd.f32 %v228, %v229
    %v231 = vrot.slane %v230, 1
    %v232 = vadd.f32 %v230, %v231
    %v233 = vrot.slane %v194, 4
    %v234 = vadd.f32 %v194, %v233
    %v235 = vrot.slane %v234, 2
    %v236 = vadd.f32 %v234, %v235
    %v237 = vrot.slane %v236, 1
    %v238 = vadd.f32 %v236, %v237
    %v239 = vrot.slane %v197, 4
    %v240 = vadd.f32 %v197, %v239
    %v241 = vrot.slane %v240, 2
    %v242 = vadd.f32 %v240, %v241
    %v243 = vrot.slane %v242, 1
    %v244 = vadd.f32 %v242, %v243
    %v245 = vrot.slane %v202, 4
    %v246 = vadd.f32 %v202, %v245
    %v247 = vrot.slane %v246, 2
    %v248 = vadd.f32 %v246, %v247
    %v249 = vrot.slane %v248, 1
    %v250 = vadd.f32 %v248, %v249
    %v251 = vrot.slane %v205, 4
    %v252 = vadd.f32 %v205, %v251
    %v253 = vrot.slane %v252, 2
    %v254 = vadd.f32 %v252, %v253
    %v255 = vrot.slane %v254, 1
    %v256 = vadd.f32 %v254, %v255
    %v257 = vmul.f32 %v214, 0.125
    %v258 = vmul.f32 %v220, 0.125
    %v259 = vmul.f32 %v226, 0.125
    %v260 = vmul.f32 %v232, 0.125
    %v261 = vmul.f32 %v238, 0.125
    %v262 = vmul.f32 %v244, 0.125
    %v263 = vmul.f32 %v250, 0.125
    %v264 = vmul.f32 %v256, 0.125
    %v266 = vlaneseq
    %v267 = vshrl.u32 %v266, 7
    %v268 = vsub.s32 0, %v267
    %v269 = vrot.slane %v208, %v268
    %v271 = vadd.f32 %v257, %v269
    %v272 = vadd.f32 %v258, %v269
    %v273 = vadd.f32 %v259, %v269
    %v274 = vadd.f32 %v260, %v269
    %v275 = vadd.f32 %v261, %v269
    %v276 = vadd.f32 %v262, %v269
    %v277 = vadd.f32 %v263, %v269
    %v278 = vadd.f32 %v264, %v269
    %v287 = vrot.slane %v272, 7
    %vm288 = vcmask 1041409
    %v289 = vsel %vm288, %v287, %v271
    %v290 = vrot.slane %v273, 6
    %vm291 = vcmask 1042434
    %v292 = vsel %vm291, %v290, %v289
    %v293 = vrot.slane %v274, 5
    %vm294 = vcmask 1043459
    %v295 = vsel %vm294, %v293, %v292
    %v296 = vrot.slane %v275, 4
    %vm297 = vcmask 1044484
    %v298 = vsel %vm297, %v296, %v295
    %v299 = vrot.slane %v276, 3
    %vm300 = vcmask 1045509
    %v301 = vsel %vm300, %v299, %v298
    %v302 = vrot.slane %v277, 2
    %vm303 = vcmask 1046534
    %v304 = vsel %vm303, %v302, %v301
    %v305 = vrot.slane %v278, 1
    %vm306 = vcmask 1047559
    %v307 = vsel %vm306, %v305, %v304
    %309 = vst [vmem:[#allocation8] sm:$0xff] %v307
    %v310 = vadd.f32 %v178, %v269
    %v311 = vadd.f32 %v181, %v269
    %v312 = vadd.f32 %v186, %v269
    %v313 = vadd.f32 %v189, %v269
    %v314 = vadd.f32 %v194, %v269
    %v315 = vadd.f32 %v197, %v269
    %v316 = vadd.f32 %v202, %v269
    %v317 = vadd.f32 %v205, %v269
    %v318 = vmul.f32 %v310, %v310
    %v319 = vmul.f32 %v311, %v311
    %v320 = vmul.f32 %v312, %v312
    %v321 = vmul.f32 %v313, %v313
    %v322 = vmul.f32 %v314, %v314
    %v323 = vmul.f32 %v315, %v315
    %v324 = vmul.f32 %v316, %v316
    %v325 = vmul.f32 %v317, %v317
    %326 = vadd.xlane.f32.xlu0 %v318
    %v327 = vpop.xlane.xlu0 %326
    %328 = vadd.xlane.f32.xlu0 %v319
    %v329 = vpop.xlane.xlu0 %328
    %330 = vadd.xlane.f32.xlu0 %v320
    %v331 = vpop.xlane.xlu0 %330
    %332 = vadd.xlane.f32.xlu0 %v321
    %v333 = vpop.xlane.xlu0 %332
    %334 = vadd.xlane.f32.xlu0 %v322
    %v335 = vpop.xlane.xlu0 %334
    %336 = vadd.xlane.f32.xlu0 %v323
    %v337 = vpop.xlane.xlu0 %336
    %338 = vadd.xlane.f32.xlu0 %v324
    %v339 = vpop.xlane.xlu0 %338
    %340 = vadd.xlane.f32.xlu0 %v325
    %v341 = vpop.xlane.xlu0 %340
    %v342 = vadd.f32 %v327, 1e-08
    %v343 = vadd.f32 %v329, 1e-08
    %v344 = vadd.f32 %v331, 1e-08
    %v345 = vadd.f32 %v333, 1e-08
    %v346 = vadd.f32 %v335, 1e-08
    %v347 = vadd.f32 %v337, 1e-08
    %v348 = vadd.f32 %v339, 1e-08
    %v349 = vadd.f32 %v341, 1e-08
    %v350 = vrsqrt.pop %v342
    %v351 = vrsqrt.pop %v343
    %v352 = vrsqrt.pop %v344
    %v353 = vrsqrt.pop %v345
    %v354 = vrsqrt.pop %v346
    %v355 = vrsqrt.pop %v347
    %v356 = vrsqrt.pop %v348
    %v357 = vrsqrt.pop %v349
    %v358 = vmul.f32 %v310, %v350
    %v359 = vmul.f32 %v311, %v351
    %v360 = vmul.f32 %v312, %v352
    %v361 = vmul.f32 %v313, %v353
    %v362 = vmul.f32 %v314, %v354
    %v363 = vmul.f32 %v315, %v355
    %v364 = vmul.f32 %v316, %v356
    %v365 = vmul.f32 %v317, %v357
    %366 = vst [vmem:[#allocation7] sm:$0xff] %v358
    %367 = vst [vmem:[#allocation7 + $0x8] sm:$0xff] %v359
    %368 = vst [vmem:[#allocation7 + $0x10] sm:$0xff] %v360
    %369 = vst [vmem:[#allocation7 + $0x18] sm:$0xff] %v361
    %370 = vst [vmem:[#allocation7 + $0x20] sm:$0xff] %v362
    %371 = vst [vmem:[#allocation7 + $0x28] sm:$0xff] %v363
    %372 = vst [vmem:[#allocation7 + $0x30] sm:$0xff] %v364
    %373 = vst [vmem:[#allocation7 + $0x38] sm:$0xff] %v365
    // Predicated region
    $region22: #{tpu_custom_call.1} parent=1 // pred_check
      _
    $region23: #{tpu_custom_call.1} parent=1 // pred_check_branch
      %375 = sbr.rel (0) target = $region25
    $region24: #{tpu_custom_call.1} parent=1 // pred_region
      %s377 = ssub.s32 1024, 1024
      %378 = vsyncadd [#allocation4], %s377
      %s379 = sshll.u32 [#allocation7], 4
      %s380 = int_to_ptr.vmem [resolvable:$true] %s379
      %385 = dma.vmem_to_hbm [thread:$0]  %s380, 1024, %s3, [#allocation4], 128, 128, 8
    $region25: #{tpu_custom_call.1} parent=1 // pred_fallthru
      _
    // Predicated region
    $region26: #{tpu_custom_call.1} parent=1 // pred_check
      _
    $region27: #{tpu_custom_call.1} parent=1 // pred_check_branch
      %387 = sbr.rel (0) target = $region29
    $region28: #{tpu_custom_call.1} parent=1 // pred_region
      %s389 = ssub.s32 128, 128
      %390 = vsyncadd [#allocation9], %s389
      %s392 = sshll.u32 [#allocation8], 4
      %s393 = int_to_ptr.vmem [resolvable:$true] %s392
      %395 = dma.vmem_to_hbm [thread:$0]  %s393, 128, %s4, [#allocation9]
    $region29: #{tpu_custom_call.1} parent=1 // pred_fallthru
      _
    // Predicated region
    $region30: #{tpu_custom_call.1} parent=1 // pred_check
      _
    $region31: #{tpu_custom_call.1} parent=1 // pred_check_branch
      %397 = sbr.rel (0) target = $region33
    $region32: #{tpu_custom_call.1} parent=1 // pred_region
      %398 = dma.done [#allocation4], 1024
    $region33: #{tpu_custom_call.1} parent=1 // pred_fallthru
      _
    // Predicated region
    $region34: #{tpu_custom_call.1} parent=1 // pred_check
      _
    $region35: #{tpu_custom_call.1} parent=1 // pred_check_branch
      %400 = sbr.rel (0) target = $region37
    $region36: #{tpu_custom_call.1} parent=1 // pred_region
      %401 = dma.done [#allocation9], 128
    $region37: #{tpu_custom_call.1} parent=1 // pred_fallthru
      _
    %402 = vsyncpa [#allocation3], 1
    %403 = vsyncpa [#allocation6], 1
    %404 = vsyncpa [#allocation4], 1
    %405 = vsyncpa [#allocation9], 1

</llo_original>
